<compile_context>
chip_gen: v5e
topology: v5e:2x2
jax: 0.10.0
libtpu: 0.0.40
codegen_flags: <defaults>
</compile_context>

<pallas_src>
import functools

import jax
import jax.numpy as jnp
import numpy as np
from jax.experimental import pallas as pl
from jax.experimental.pallas import tpu as pltpu


def _round_up(x, m):
    return (x + m - 1) // m * m


# ---------------------------------------------------------------------------
# Kernels
# ---------------------------------------------------------------------------
def _linear_kernel_fused(x_ref, w_ref, b_ref, o_ref):
    """Fast path: whole K in one block, W / bias VMEM-resident.
    No accumulator scratch -> one MXU pass + bias add + store per M tile."""
    o_ref[...] = (
        jnp.dot(x_ref[...], w_ref[...], preferred_element_type=jnp.float32)
        + b_ref[...]
    ).astype(o_ref.dtype)


def _linear_kernel_acc(x_ref, w_ref, b_ref, o_ref, acc_ref):
    """General path: K split over the innermost ('arbitrary') grid axis.
    Bias is folded into the accumulator init; finalize is a pure cast."""
    k = pl.program_id(2)

    @pl.when(k == 0)
    def _():
        acc_ref[...] = jnp.broadcast_to(
            b_ref[...].astype(jnp.float32), acc_ref.shape)

    acc_ref[...] += jnp.dot(x_ref[...], w_ref[...],
                            preferred_element_type=jnp.float32)

    @pl.when(k == pl.num_programs(2) - 1)
    def _():
        o_ref[...] = acc_ref[...].astype(o_ref.dtype)


# ---------------------------------------------------------------------------
# Wrapper
# ---------------------------------------------------------------------------
def linear_encoder(x, w, b, *, tm=512, tn=512, tk=1024,
                   vmem_budget_bytes=32 * 1024 * 1024):
    """h = x @ w + b.

    x: [M, F_in]     (rows = nodes / tokens)
    w: [F_in, F_out] (torch Linear weight, already transposed)
    b: [F_out]
    """
    m, k = x.shape
    k2, n = w.shape
    assert k == k2, (k, k2)
    itemsize = jnp.dtype(x.dtype).itemsize

    # Lane-dense output dim: pad only the small weight / bias along N when
    # needed.  x is never padded; the output is sliced only if N was padded.
    n_pad = _round_up(n, 128)
    if n_pad != n:
        w = jnp.pad(w, ((0, 0), (0, n_pad - n)))
        b = jnp.pad(b, ((0, n_pad - n),))
    b2 = b.reshape(1, n_pad)

    # M tiling: no padding.  Partial trailing M block is safe (overhang rows
    # only feed output rows Pallas discards).  Keep >= 2 M tiles so both v7x
    # TensorCores get work; harmless on single-TC v5e/v6e.
    tm = max(8, min(tm, _round_up(pl.cdiv(m, 2), 8)))
    grid_m = pl.cdiv(m, tm)

    # Resident-W fast-path footprint (double-buffered x / out, W + bias once).
    fast_footprint = itemsize * (2 * tm * k + 2 * k * n_pad
                                 + 2 * tm * n_pad + 2 * n_pad)
    use_fast = fast_footprint <= vmem_budget_bytes

    compiler_kwargs = {}
    if use_fast:
        grid = (grid_m,)
        in_specs = [
            pl.BlockSpec((tm, k), lambda i: (i, 0)),      # x: streamed over M
            pl.BlockSpec((k, n_pad), lambda i: (0, 0)),   # W: resident (1 DMA)
            pl.BlockSpec((1, n_pad), lambda i: (0, 0)),   # bias: resident
        ]
        out_specs = pl.BlockSpec((tm, n_pad), lambda i: (i, 0))
        scratch_shapes = []
        kernel = _linear_kernel_fused
        compiler_kwargs["dimension_semantics"] = ("parallel",)
        flops = 2 * m * k * n_pad
        bytes_accessed = itemsize * (m * k + k * n_pad + m * n_pad + n_pad)
        if fast_footprint > 16 * 1024 * 1024:
            # Stay under the v5e scoped default / v7x 64 MiB physical VMEM.
            compiler_kwargs["vmem_limit_bytes"] = int(
                min(60 * 1024 * 1024, fast_footprint * 3 // 2))
        x_in, w_in = x, w
    else:
        # General path: 3-D (M, N, K) grid with f32 accumulator.
        tn_f = min(tn, n_pad)                      # multiple of 128
        tk_f = min(tk, _round_up(k, 128))
        kp = _round_up(k, tk_f)
        # K blocks must never overhang the array (garbage would enter the
        # reduction), so pad x / w along K with zeros -> numerics unchanged.
        x_in = jnp.pad(x, ((0, 0), (0, kp - k))) if kp != k else x
        w_in = jnp.pad(w, ((0, kp - k), (0, 0))) if kp != k else w
        grid = (grid_m, pl.cdiv(n_pad, tn_f), kp // tk_f)
        in_specs = [
            pl.BlockSpec((tm, tk_f), lambda i, j, kk: (i, kk)),
            pl.BlockSpec((tk_f, tn_f), lambda i, j, kk: (kk, j)),
            pl.BlockSpec((1, tn_f), lambda i, j, kk: (0, j)),
        ]
        out_specs = pl.BlockSpec((tm, tn_f), lambda i, j, kk: (i, j))
        scratch_shapes = [pltpu.VMEM((tm, tn_f), jnp.float32)]
        kernel = _linear_kernel_acc
        compiler_kwargs["dimension_semantics"] = (
            "parallel", "parallel", "arbitrary")
        flops = 2 * m * kp * n_pad
        # W is re-streamed once per M tile and x once per N tile under this
        # loop nest; reflect that so XLA overlaps the call realistically.
        bytes_accessed = itemsize * (
            grid[1] * m * kp + grid_m * kp * n_pad + m * n_pad + n_pad)

    out = pl.pallas_call(
        kernel,
        out_shape=jax.ShapeDtypeStruct((m, n_pad), x.dtype),
        grid_spec=pltpu.PrefetchScalarGridSpec(
            num_scalar_prefetch=0,
            grid=grid,
            in_specs=in_specs,
            out_specs=out_specs,
            scratch_shapes=scratch_shapes,
        ),
        compiler_params=pltpu.CompilerParams(**compiler_kwargs),
        cost_estimate=pl.CostEstimate(
            flops=flops, transcendentals=0, bytes_accessed=bytes_accessed),
    )(x_in, w_in, b2)

    return out if n_pad == n else out[:, :n]


@jax.jit
def mlp_encoder_forward(x, params):
    # MLP_encoder.forward(x, edge_index=None, mask_node=None) -> self.lin(x)
    # edge_index / mask_node are ignored by the reference module's forward.
    return linear_encoder(x, params["w"], params["b"])


if __name__ == "__main__":
    key = jax.random.PRNGKey(0)

    # Small shapes consistent with the module: N nodes, num_features, hidden.
    num_nodes, num_features, hidden = 256, 64, 128

    kx, kw, kb = jax.random.split(key, 3)
    x = jax.random.normal(kx, (num_nodes, num_features), jnp.float32)

    # torch.nn.Linear default init: U(-1/sqrt(fan_in), 1/sqrt(fan_in)).
    bound = 1.0 / float(np.sqrt(num_features))
    # Stored as [F_in, F_out] (torch weight [hidden, num_features] transposed).
    w = jax.random.uniform(kw, (num_features, hidden), jnp.float32, -bound, bound)
    b = jax.random.uniform(kb, (hidden,), jnp.float32, -bound, bound)
    params = {"w": w, "b": b}

    out = mlp_encoder_forward(x, params)
    jax.block_until_ready(out)

    ref = x @ w + b
    np.testing.assert_allclose(np.asarray(out), np.asarray(ref),
                               rtol=1e-5, atol=1e-5)

    print("KERNEL_OK")
</pallas_src>

<mosaic_0001>
module attributes {stable_mosaic.version = 11 : i64} {
  func.func @_linear_kernel_fused(%arg0: i32, %arg1: memref<128x64xf32, #tpu.memory_space<vmem>>, %arg2: memref<64x128xf32, #tpu.memory_space<vmem>>, %arg3: memref<1x128xf32, #tpu.memory_space<vmem>>, %arg4: memref<128x128xf32, #tpu.memory_space<vmem>>) attributes {dimension_semantics = [#tpu.dimension_semantics<parallel>], iteration_bounds = array<i64: 2>, scalar_prefetch = 0 : i64, scratch_operands = 0 : i64, tpu.core_type = #tpu.core_type<tc>, window_params = [{transform_indices = @transform_0, window_bounds = array<i64: 128, 64>}, {pipeline_mode = #tpu.pipeline_mode<synchronous>, transform_indices = @transform_1, window_bounds = array<i64: 64, 128>}, {pipeline_mode = #tpu.pipeline_mode<synchronous>, transform_indices = @transform_2, window_bounds = array<i64: 1, 128>}, {transform_indices = @transform_3, window_bounds = array<i64: 128, 128>}]} {
    %c0 = arith.constant 0 : index
    %c0_0 = arith.constant 0 : index
    %0 = vector.load %arg1[%c0, %c0_0] : memref<128x64xf32, #tpu.memory_space<vmem>>, vector<128x64xf32>
    %c0_1 = arith.constant 0 : index
    %c0_2 = arith.constant 0 : index
    %1 = vector.load %arg2[%c0_1, %c0_2] : memref<64x128xf32, #tpu.memory_space<vmem>>, vector<64x128xf32>
    %cst = arith.constant dense<0.000000e+00> : vector<128x128xf32>
    %2 = tpu.matmul %0, %1, %cst {dimension_numbers = #tpu.dot_dimension_numbers<[1], [0], [0], [1], [0, 0, 1, 1], [], []>} : vector<128x64xf32>, vector<64x128xf32>, vector<128x128xf32> -> vector<128x128xf32>
    %c0_3 = arith.constant 0 : index
    %c0_4 = arith.constant 0 : index
    %3 = vector.load %arg3[%c0_3, %c0_4] : memref<1x128xf32, #tpu.memory_space<vmem>>, vector<1x128xf32>
    %4 = vector.broadcast %3 : vector<1x128xf32> to vector<128x128xf32>
    %5 = arith.addf %2, %4 : vector<128x128xf32>
    %c0_5 = arith.constant 0 : index
    %c0_6 = arith.constant 0 : index
    %6 = vector.load %arg4[%c0_5, %c0_6] : memref<128x128xf32, #tpu.memory_space<vmem>>, vector<128x128xf32>
    tpu.vector_store %arg4[%c0_5, %c0_6], %5 {strides = array<i32>} : memref<128x128xf32, #tpu.memory_space<vmem>>, vector<128x128xf32>,
    return
  }
  func.func @transform_0(%arg0: i32) -> (i32, i32) {
    %c0_i32 = arith.constant 0 : i32
    %c0_i32_0 = arith.constant 0 : i32
    return %arg0, %c0_i32 : i32, i32
  }
  func.func @transform_1(%arg0: i32) -> (i32, i32) {
    %c0_i32 = arith.constant 0 : i32
    %c0_i32_0 = arith.constant 0 : i32
    %c0_i32_1 = arith.constant 0 : i32
    return %c0_i32, %c0_i32_0 : i32, i32
  }
  func.func @transform_2(%arg0: i32) -> (i32, i32) {
    %c0_i32 = arith.constant 0 : i32
    %c0_i32_0 = arith.constant 0 : i32
    %c0_i32_1 = arith.constant 0 : i32
    return %c0_i32, %c0_i32_0 : i32, i32
  }
  func.func @transform_3(%arg0: i32) -> (i32, i32) {
    %c0_i32 = arith.constant 0 : i32
    %c0_i32_0 = arith.constant 0 : i32
    return %arg0, %c0_i32 : i32, i32
  }
}

</mosaic_0001>

<llo_original>
// kernel: mlp_encoder_forward.1
$region0: #{mlp_encoder_forward.1}
  #allocation0 [shape = 'u32[]', space=smem, size = 0x4, offset = 0x4, fixed_abs, tag = 'smem constant byte address 0x4 - core index']
  #allocation1 [shape = 'u32[72,128]{1,0:T(1,128)}', space=vmem, size = 0x9000, scoped, tag = 'internal scratch']
  %s0 = inlined_call_operand.vmem [shape: f32[256,64], index: 0, kind: input, shape index: {}]
  %s1 = inlined_call_operand.vmem [shape: f32[64,128], index: 1, kind: input, shape index: {}]
  %s2 = inlined_call_operand.vmem [shape: f32[1,128], index: 2, kind: input, shape index: {}]
  %s3 = inlined_call_operand.hbm [shape: f32[256,128], index: 3, kind: output, shape index: {}]
  %s4 = sld [smem:[#allocation0]]
  $region45: #{mlp_encoder_forward.1} parent=0
    _
  %s6 = ssub.s32 1, %s4
  %s7 = scalar_select 0, %s6, %s4
  $region1: #{mlp_encoder_forward.1} parent=0
    #allocation2 [shape = 'u8[131072]{0}', space=vmem, size = 0x20000, scoped, tag = 'output window, operand 0']
    #allocation3 [shape = 's32[2]{0}', space=sflag, size = 0x8, scoped, tag = 'scoped memory for mlp_encoder_forward.1']
    %8 = vsyncpa [#allocation3], 0
    %s9 = scalar_lea.sflag [#allocation3], 1
    %10 = vsyncpa %s9, 0
    loop: start=0, step=1, limit=4
    $region2: #{mlp_encoder_forward.1} parent=1 // loop_pre_header
      _
    $region3: #{mlp_encoder_forward.1} parent=1 // loop_header
      %s12 = sphi 0, %s16
      %p13 = scmp.ge.s32.totalorder %s12, 4
      %s22 = sphi 0, %s24
      %s25 = sphi 0, %s22
      %s26 = sphi 0, %s25
      %s42 = sphi 0, %s26
      %s46 = sphi 0, %s46
      %s48 = sphi 0, %s46
      %s49 = sphi 0, %s48
      %s63 = sphi 0, %s49
      %s67 = sphi 0, %s67
      %s69 = sphi 0, %s67
      %s70 = sphi 0, %s69
      %s84 = sphi 0, %s70
      %s90 = sphi 0, %s92
      %s93 = sphi 0, %s90
      %s94 = sphi 0, %s93
      %s110 = sphi 0, %s94
    $region4: #{mlp_encoder_forward.1} parent=1 // loop_header_branch
      %15 = sbr.rel (%p13) target = $region8
    $region5: #{mlp_encoder_forward.1} parent=1 // loop_body
      %s17 = ssub.s32 %s12, 1
      %s18 = ssub.s32 %s12, 2
      %s19 = sadd.s32 %s12, 1
      %s20 = ssub.s32 %s12, %s19
      %p21 = scmp.eq.s32.totalorder %s20, 0
      %s23 = sadd.s32 %s22, 1
      %s24 = scalar_select %p21, %s22, %s23
      %p27 = pneg %p21
      %p28 = scmp.eq.s32.totalorder %s12, 1
      %p29 = por %p27, %p28
      %p30 = scmp.ne.s32.totalorder %s22, %s25
      %p31 = scmp.eq.s32.totalorder %s12, 0
      %p32 = por %p30, %p31
      %p33 = scmp.ne.s32.totalorder %s22, %s25
      %p34 = scmp.eq.s32.totalorder %s17, 1
      %p35 = por %p33, %p34
      %p36 = scmp.ne.s32.totalorder %s25, %s26
      %p37 = scmp.eq.s32.totalorder %s17, 0
      %p38 = por %p36, %p37
      %p39 = scmp.ne.s32.totalorder %s25, %s26
      %p40 = scmp.eq.s32.totalorder %s18, 1
      %p41 = por %p39, %p40
      %p43 = scmp.ne.s32.totalorder %s26, %s42
      %p44 = scmp.eq.s32.totalorder %s18, 0
      %p45 = por %p43, %p44
      %s47 = sadd.s32 %s46, 1
      %p50 = scmp.eq.s32.totalorder %s12, 1
      %p51 = scmp.ne.s32.totalorder %s46, %s48
      %p52 = scmp.eq.s32.totalorder %s12, 0
      %p53 = por %p51, %p52
      %p54 = scmp.ne.s32.totalorder %s46, %s48
      %p55 = scmp.eq.s32.totalorder %s17, 1
      %p56 = por %p54, %p55
      %p57 = scmp.ne.s32.totalorder %s48, %s49
      %p58 = scmp.eq.s32.totalorder %s17, 0
      %p59 = por %p57, %p58
      %p60 = scmp.ne.s32.totalorder %s48, %s49
      %p61 = scmp.eq.s32.totalorder %s18, 1
      %p62 = por %p60, %p61
      %p64 = scmp.ne.s32.totalorder %s49, %s63
      %p65 = scmp.eq.s32.totalorder %s18, 0
      %p66 = por %p64, %p65
      %s68 = sadd.s32 %s67, 1
      %p71 = scmp.eq.s32.totalorder %s12, 1
      %p72 = scmp.ne.s32.totalorder %s67, %s69
      %p73 = scmp.eq.s32.totalorder %s12, 0
      %p74 = por %p72, %p73
      %p75 = scmp.ne.s32.totalorder %s67, %s69
      %p76 = scmp.eq.s32.totalorder %s17, 1
      %p77 = por %p75, %p76
      %p78 = scmp.ne.s32.totalorder %s69, %s70
      %p79 = scmp.eq.s32.totalorder %s17, 0
      %p80 = por %p78, %p79
      %p81 = scmp.ne.s32.totalorder %s69, %s70
      %p82 = scmp.eq.s32.totalorder %s18, 1
      %p83 = por %p81, %p82
      %p85 = scmp.ne.s32.totalorder %s70, %s84
      %p86 = scmp.eq.s32.totalorder %s18, 0
      %p87 = por %p85, %p86
      %s88 = ssub.s32 %s12, %s19
      %p89 = scmp.eq.s32.totalorder %s88, 0
      %s91 = sadd.s32 %s90, 1
      %s92 = scalar_select %p89, %s90, %s91
      %p95 = pneg %p89
      %p96 = scmp.eq.s32.totalorder %s12, 1
      %p97 = por %p95, %p96
      %p98 = scmp.ne.s32.totalorder %s90, %s93
      %p99 = scmp.eq.s32.totalorder %s12, 0
      %p100 = por %p98, %p99
      %p101 = scmp.ne.s32.totalorder %s90, %s93
      %p102 = scmp.eq.s32.totalorder %s17, 1
      %p103 = por %p101, %p102
      %p104 = scmp.ne.s32.totalorder %s93, %s94
      %p105 = scmp.eq.s32.totalorder %s17, 0
      %p106 = por %p104, %p105
      %p107 = scmp.ne.s32.totalorder %s93, %s94
      %p108 = scmp.eq.s32.totalorder %s18, 1
      %p109 = por %p107, %p108
      %p111 = scmp.ne.s32.totalorder %s94, %s110
      %p112 = scmp.eq.s32.totalorder %s18, 0
      %p113 = por %p111, %p112
      %p114 = scmp.le.s32.totalorder 1, %s12
      %p115 = scmp.lt.s32.totalorder %s12, 3
      %p116 = pnand %p114, %p115
      %p117 = pneg %p116
      // Predicated region
      $region9: #{mlp_encoder_forward.1} parent=5 // pred_check
        _
      $region10: #{mlp_encoder_forward.1} parent=5 // pred_check_branch
        %119 = sbr.rel (%p116) target = $region12
      $region11: #{mlp_encoder_forward.1} parent=5 // pred_region
        %s120 = ssub.s32 %s12, 1
        // Predicated region
        $region13: #{mlp_encoder_forward.1} parent=11 // pred_check
          %p121 = pneg %p59
        $region14: #{mlp_encoder_forward.1} parent=11 // pred_check_branch
          %123 = sbr.rel (%p121) target = $region16
        $region15: #{mlp_encoder_forward.1} parent=11 // pred_region
          _
        $region16: #{mlp_encoder_forward.1} parent=11 // pred_fallthru
          _
        // Predicated region
        $region17: #{mlp_encoder_forward.1} parent=11 // pred_check
          %p124 = pneg %p80
        $region18: #{mlp_encoder_forward.1} parent=11 // pred_check_branch
          %126 = sbr.rel (%p124) target = $region20
        $region19: #{mlp_encoder_forward.1} parent=11 // pred_region
          _
        $region20: #{mlp_encoder_forward.1} parent=11 // pred_fallthru
          _
      $region12: #{mlp_encoder_forward.1} parent=5 // pred_fallthru
        _
      %p127 = scmp.lt.s32.totalorder %s12, 2
      // Predicated region
      $region21: #{mlp_encoder_forward.1} parent=5 // pred_check
        %p128 = pneg %p127
      $region22: #{mlp_encoder_forward.1} parent=5 // pred_check_branch
        %130 = sbr.rel (%p128) target = $region24
      $region23: #{mlp_encoder_forward.1} parent=5 // pred_region
        // Predicated region
        $region25: #{mlp_encoder_forward.1} parent=23 // pred_check
          %p131 = pneg %p32
        $region26: #{mlp_encoder_forward.1} parent=23 // pred_check_branch
          %133 = sbr.rel (%p131) target = $region28
        $region27: #{mlp_encoder_forward.1} parent=23 // pred_region
          %s134 = smul.u32 16, %s12
          %p135 = scmp.lt.s32.totalorder %s134, 31
          %s136 = scalar_select %p135, %s134, 31
          %s137 = smul.addr %s136, 8
          %s138 = scalar_lea.vmem %s0, %s137
          %s139 = smul.u32 16, %s12
        $region28: #{mlp_encoder_forward.1} parent=23 // pred_fallthru
          _
      $region24: #{mlp_encoder_forward.1} parent=5 // pred_fallthru
        _
      %p140 = scmp.le.s32.totalorder 1, %s12
      %p141 = scmp.lt.s32.totalorder %s12, 3
      %p142 = pnand %p140, %p141
      %p143 = pneg %p142
      // Predicated region
      $region29: #{mlp_encoder_forward.1} parent=5 // pred_check
        _
      $region30: #{mlp_encoder_forward.1} parent=5 // pred_check_branch
        %145 = sbr.rel (%p142) target = $region32
      $region31: #{mlp_encoder_forward.1} parent=5 // pred_region
        %s146 = ssub.s32 %s12, 1
        %s147 = smul.u32 16, %s17
        %p148 = scmp.lt.s32.totalorder %s147, 31
        %s149 = scalar_select %p148, %s147, 31
        %s150 = smul.addr %s149, 8
        %s151 = scalar_lea.vmem %s0, %s150
        %p152 = pneg %p38
        %p153 = pneg %p35
        %p154 = pneg %p59
        %p155 = pneg %p56
        %p156 = pneg %p80
        %p157 = pneg %p77
        %p158 = pneg %p106
        %p159 = pneg %p103
        %s160 = sand.u32 %s93, 1
        %s161 = scalar_lea.sflag [#allocation3], %s160
        %s162 = sand.u32 %s93, 1
        %s163 = smul.addr %s162, 128
        %s164 = scalar_lea.vmem [#allocation2], %s163
        %s165 = smul.u32 16, %s17
        %p166 = scmp.lt.s32.totalorder %s165, 31
        %s167 = scalar_select %p166, %s165, 31
        %s168 = smul.addr %s167, 8
        %s169 = scalar_lea.vmem %s0, %s168
        %s170 = smul.u32 16, %s17
        %s171 = smul.u32 16, %s17
        %v172 = vld [vmem:[%s169] sm:$0xff]
        %v173 = vld [vmem:[%s169 + $0x8] sm:$0xff]
        %v174 = vld [vmem:[%s169 + $0x10] sm:$0xff]
        %v175 = vld [vmem:[%s169 + $0x18] sm:$0xff]
        %v176 = vld [vmem:[%s169 + $0x20] sm:$0xff]
        %v177 = vld [vmem:[%s169 + $0x28] sm:$0xff]
        %v178 = vld [vmem:[%s169 + $0x30] sm:$0xff]
        %v179 = vld [vmem:[%s169 + $0x38] sm:$0xff]
        %v180 = vld [vmem:[%s169 + $0x40] sm:$0xff]
        %v181 = vld [vmem:[%s169 + $0x48] sm:$0xff]
        %v182 = vld [vmem:[%s169 + $0x50] sm:$0xff]
        %v183 = vld [vmem:[%s169 + $0x58] sm:$0xff]
        %v184 = vld [vmem:[%s169 + $0x60] sm:$0xff]
        %v185 = vld [vmem:[%s169 + $0x68] sm:$0xff]
        %v186 = vld [vmem:[%s169 + $0x70] sm:$0xff]
        %v187 = vld [vmem:[%s169 + $0x78] sm:$0xff]
        %v188 = vld [vmem:[%s1] sm:$0xff]
        %v189 = vld [vmem:[%s1 + $0x8] sm:$0xff]
        %v190 = vld [vmem:[%s1 + $0x10] sm:$0xff]
        %v191 = vld [vmem:[%s1 + $0x18] sm:$0xff]
        %v192 = vld [vmem:[%s1 + $0x20] sm:$0xff]
        %v193 = vld [vmem:[%s1 + $0x28] sm:$0xff]
        %v194 = vld [vmem:[%s1 + $0x30] sm:$0xff]
        %v195 = vld [vmem:[%s1 + $0x38] sm:$0xff]
        %v196 = vld [vmem:[%s2] sm:$0x1]
        %v198 = vperm.slane %v196, 0
        %vm200 = vcmask 523264
        %v202 = vsel %vm200, %v172, 0
        %v205 = vsel %vm200, %v173, 0
        %v208 = vsel %vm200, %v174, 0
        %v211 = vsel %vm200, %v175, 0
        %v214 = vsel %vm200, %v176, 0
        %v217 = vsel %vm200, %v177, 0
        %v220 = vsel %vm200, %v178, 0
        %v223 = vsel %vm200, %v179, 0
        %v226 = vsel %vm200, %v180, 0
        %v229 = vsel %vm200, %v181, 0
        %v232 = vsel %vm200, %v182, 0
        %v235 = vsel %vm200, %v183, 0
        %v238 = vsel %vm200, %v184, 0
        %v241 = vsel %vm200, %v185, 0
        %v244 = vsel %vm200, %v186, 0
        %v247 = vsel %vm200, %v187, 0
        %249 = vmatpush.msra.mxu0 0.0
        %250 = vmatpush.msra.mxu0 0.0
        %251 = vmatpush.msra.mxu0 0.0
        %252 = vmatpush.msra.mxu0 0.0
        %253 = vmatpush.msra.mxu0 0.0
        %254 = vmatpush.msra.mxu0 0.0
        %255 = vmatpush.msra.mxu0 0.0
        %256 = vmatpush.msra.mxu0 0.0
        %257 = vmatpush.msra.mxu0 %v195
        %258 = vmatpush.msra.mxu0 %v194
        %259 = vmatpush.msra.mxu0 %v193
        %260 = vmatpush.msra.mxu0 %v192
        %261 = vmatpush.msra.mxu0 %v191
        %262 = vmatpush.msra.mxu0 %v190
        %263 = vmatpush.msra.mxu0 %v189
        %264 = vmatpush.msra.mxu0 %v188
        %265 = vmatmul.f32.gmra.mxu0 %v202
        %v266 = vpop.f32.mrf.mxu0
        %v267 = vadd.f32 %v198, %v266
        %268 = vmatmul.f32.gmra.mxu0 %v205
        %v269 = vpop.f32.mrf.mxu0
        %v270 = vadd.f32 %v198, %v269
        %271 = vmatmul.f32.gmra.mxu0 %v208
        %v272 = vpop.f32.mrf.mxu0
        %v273 = vadd.f32 %v198, %v272
        %274 = vmatmul.f32.gmra.mxu0 %v211
        %v275 = vpop.f32.mrf.mxu0
        %v276 = vadd.f32 %v198, %v275
        %277 = vmatmul.f32.gmra.mxu0 %v214
        %v278 = vpop.f32.mrf.mxu0
        %v279 = vadd.f32 %v198, %v278
        %280 = vmatmul.f32.gmra.mxu0 %v217
        %v281 = vpop.f32.mrf.mxu0
        %v282 = vadd.f32 %v198, %v281
        %283 = vmatmul.f32.gmra.mxu0 %v220
        %v284 = vpop.f32.mrf.mxu0
        %v285 = vadd.f32 %v198, %v284
        %286 = vmatmul.f32.gmra.mxu0 %v223
        %v287 = vpop.f32.mrf.mxu0
        %v288 = vadd.f32 %v198, %v287
        %289 = vmatmul.f32.gmra.mxu0 %v226
        %v290 = vpop.f32.mrf.mxu0
        %v291 = vadd.f32 %v198, %v290
        %292 = vmatmul.f32.gmra.mxu0 %v229
        %v293 = vpop.f32.mrf.mxu0
        %v294 = vadd.f32 %v198, %v293
        %295 = vmatmul.f32.gmra.mxu0 %v232
        %v296 = vpop.f32.mrf.mxu0
        %v297 = vadd.f32 %v198, %v296
        %298 = vmatmul.f32.gmra.mxu0 %v235
        %v299 = vpop.f32.mrf.mxu0
        %v300 = vadd.f32 %v198, %v299
        %301 = vmatmul.f32.gmra.mxu0 %v238
        %v302 = vpop.f32.mrf.mxu0
        %v303 = vadd.f32 %v198, %v302
        %304 = vmatmul.f32.gmra.mxu0 %v241
        %v305 = vpop.f32.mrf.mxu0
        %v306 = vadd.f32 %v198, %v305
        %307 = vmatmul.f32.gmra.mxu0 %v244
        %v308 = vpop.f32.mrf.mxu0
        %v309 = vadd.f32 %v198, %v308
        %310 = vmatmul.f32.gmra.mxu0 %v247
        %v311 = vpop.f32.mrf.mxu0
        %v312 = vadd.f32 %v198, %v311
        %313 = vdwg.mxu0
        %314 = vst [vmem:[%s164] sm:$0xff] %v267
        %315 = vst [vmem:[%s164 + $0x8] sm:$0xff] %v270
        %316 = vst [vmem:[%s164 + $0x10] sm:$0xff] %v273
        %317 = vst [vmem:[%s164 + $0x18] sm:$0xff] %v276
        %318 = vst [vmem:[%s164 + $0x20] sm:$0xff] %v279
        %319 = vst [vmem:[%s164 + $0x28] sm:$0xff] %v282
        %320 = vst [vmem:[%s164 + $0x30] sm:$0xff] %v285
        %321 = vst [vmem:[%s164 + $0x38] sm:$0xff] %v288
        %322 = vst [vmem:[%s164 + $0x40] sm:$0xff] %v291
        %323 = vst [vmem:[%s164 + $0x48] sm:$0xff] %v294
        %324 = vst [vmem:[%s164 + $0x50] sm:$0xff] %v297
        %325 = vst [vmem:[%s164 + $0x58] sm:$0xff] %v300
        %326 = vst [vmem:[%s164 + $0x60] sm:$0xff] %v303
        %327 = vst [vmem:[%s164 + $0x68] sm:$0xff] %v306
        %328 = vst [vmem:[%s164 + $0x70] sm:$0xff] %v309
        %329 = vst [vmem:[%s164 + $0x78] sm:$0xff] %v312
        %s330 = sand.u32 %s93, 1
        %s331 = scalar_lea.sflag [#allocation3], %s330
        %s332 = sand.u32 %s93, 1
        %s333 = smul.addr %s332, 128
        %s334 = scalar_lea.vmem [#allocation2], %s333
        // Predicated region
        $region33: #{mlp_encoder_forward.1} parent=31 // pred_check
          %p335 = pneg %p103
        $region34: #{mlp_encoder_forward.1} parent=31 // pred_check_branch
          %337 = sbr.rel (%p335) target = $region36
        $region35: #{mlp_encoder_forward.1} parent=31 // pred_region
          %s338 = smul.u32 16, %s17
          %340 = vsyncadd %s331, 0
          %s341 = smul.addr %s338, 8
          %s342 = scalar_lea.hbm %s3, %s341
          %s343 = sshll.u32 %s334, 4
          %s344 = int_to_ptr.vmem [resolvable:$true] %s343
          %s345 = sshll.u32 %s342, 4
          %s346 = int_to_ptr.hbm [resolvable:$true] %s345
          %351 = dma.vmem_to_hbm [thread:$0]  %s344, 2048, %s346, %s331, 128, 128, 8
        $region36: #{mlp_encoder_forward.1} parent=31 // pred_fallthru
          _
      $region32: #{mlp_encoder_forward.1} parent=5 // pred_fallthru
        _
      %p352 = scmp.le.s32.totalorder 2, %s12
      // Predicated region
      $region37: #{mlp_encoder_forward.1} parent=5 // pred_check
        %p353 = pneg %p352
      $region38: #{mlp_encoder_forward.1} parent=5 // pred_check_branch
        %355 = sbr.rel (%p353) target = $region40
      $region39: #{mlp_encoder_forward.1} parent=5 // pred_region
        %s356 = ssub.s32 %s12, 2
        // Predicated region
        $region41: #{mlp_encoder_forward.1} parent=39 // pred_check
          %p357 = pneg %p109
        $region42: #{mlp_encoder_forward.1} parent=39 // pred_check_branch
          %359 = sbr.rel (%p357) target = $region44
        $region43: #{mlp_encoder_forward.1} parent=39 // pred_region
          %s360 = sand.u32 %s94, 1
          %s361 = scalar_lea.sflag [#allocation3], %s360
          %s362 = sand.u32 %s94, 1
          %s363 = smul.addr %s362, 128
          %s364 = scalar_lea.vmem [#allocation2], %s363
          %366 = dma.done %s361, 2048
        $region44: #{mlp_encoder_forward.1} parent=39 // pred_fallthru
          _
      $region40: #{mlp_encoder_forward.1} parent=5 // pred_fallthru
        _
    $region6: #{mlp_encoder_forward.1} parent=1 // loop_footer
      %s16 = sadd.s32 1, %s12
    $region7: #{mlp_encoder_forward.1} parent=1 // loop_footer_branch
      %11 = sbr.rel target = $region3
    $region8: #{mlp_encoder_forward.1} parent=1 // loop_exit
      _
    %367 = vsyncpa [#allocation3], 1
    %s368 = scalar_lea.sflag [#allocation3], 1
    %369 = vsyncpa %s368, 1

</llo_original>
